<compile_context>
chip_gen: v7x
topology: tpu7x:2x2x1
jax: 0.10.0
libtpu: 0.0.40
codegen_flags: <defaults>
</compile_context>

<pallas_src>
import functools

import jax
import jax.numpy as jnp
from jax.experimental import pallas as pl
from jax.experimental.pallas import tpu as pltpu


def phrase_sim_kernel(seq1_ref, seq2_ref,
                      wenc_ref, benc_ref,
                      w1_ref, b1_ref,
                      w2row_ref, b2_ref,
                      out_ref, *, odim):
    # --- synthetic encoder: time-sum (1/L folded into wenc), linear, tanh ---
    seq1 = seq1_ref[...].astype(jnp.float32)            # [L, Bt, idim]
    seq2 = seq2_ref[...].astype(jnp.float32)
    pooled1 = jnp.sum(seq1, axis=0)                      # [Bt, idim]
    pooled2 = jnp.sum(seq2, axis=0)

    wenc = wenc_ref[...]                                 # [idim, odim] (pre-scaled by 1/L)
    benc = benc_ref[...]                                 # [1, odim]
    h1 = jnp.tanh(jnp.dot(pooled1, wenc, preferred_element_type=jnp.float32) + benc)
    h2 = jnp.tanh(jnp.dot(pooled2, wenc, preferred_element_type=jnp.float32) + benc)

    # --- FourWay + Linear(4*odim, odim): no lane-dim concatenate; instead
    # four small matmuls against static row-blocks of w1 (sublane-aligned). ---
    w1a = w1_ref[0 * odim:1 * odim, :]
    w1b = w1_ref[1 * odim:2 * odim, :]
    w1c = w1_ref[2 * odim:3 * odim, :]
    w1d = w1_ref[3 * odim:4 * odim, :]
    z = (jnp.dot(h1, w1a, preferred_element_type=jnp.float32)
         + jnp.dot(h2, w1b, preferred_element_type=jnp.float32)
         + jnp.dot(jnp.abs(h1 - h2), w1c, preferred_element_type=jnp.float32)
         + jnp.dot(h1 * h2, w1d, preferred_element_type=jnp.float32)
         + b1_ref[...])                                  # [Bt, odim]
    z = jnp.maximum(z, 0.0)

    # --- Linear(odim, 1) as VPU multiply + lane reduction, then Sigmoid ---
    w2row = w2row_ref[...]                               # [1, odim]
    logits = jnp.sum(z * w2row, axis=-1) + b2_ref[0]     # [Bt]
    probs = 1.0 / (1.0 + jnp.exp(-logits))
    out_ref[...] = probs[None, :].astype(out_ref.dtype)  # lane-dense (1, Bt)


def _ceil_to(x, m):
    return ((x + m - 1) // m) * m


def _padded_tile_bytes(shape, itemsize=4):
    """Rough (8,128)-padded VMEM footprint of one block."""
    if len(shape) == 1:
        return _ceil_to(shape[0], 128) * itemsize
    lead = 1
    for d in shape[:-2]:
        lead *= d
    return lead * _ceil_to(shape[-2], 8) * _ceil_to(shape[-1], 128) * itemsize


def phrase_sim(seq1, seq2, params, *, b_tile=None):
    """seq1/seq2: [L, B, idim] float32. Returns [B, 1] probabilities."""
    wenc, benc, w1, b1, w2, b2 = (params[k] for k in
                                  ("wenc", "benc", "w1", "b1", "w2", "b2"))
    L, B, idim = seq1.shape
    odim = wenc.shape[1]

    # One block per call for small batches (grid steps are a sequential loop on
    # v5e/v6e); 128-lane-aligned batch tiles once B is large.
    if b_tile is None:
        b_tile = B if B <= 128 else 128
    assert B % b_tile == 0, "batch must divide evenly into batch tiles"
    if b_tile != B:
        assert b_tile % 128 == 0, "partial batch tiles must be 128-lane aligned"
    num_blocks = B // b_tile

    # Fold the Avg 1/L scale into the encoder weight (kernel sums over time).
    wenc_scaled = wenc * (1.0 / L)
    # Final Linear(odim, 1) weight as a lane-dense row; bias as an SMEM scalar.
    w2_row = w2.reshape(1, odim)
    b2_s = b2.reshape(1)

    # Size VMEM from the block shapes (double-buffered seq blocks + resident
    # weights + output), clamped for v7x's 64 MiB physical VMEM.
    seq_blk = _padded_tile_bytes((L, b_tile, idim))
    weight_bytes = (_padded_tile_bytes((idim, odim))
                    + 3 * _padded_tile_bytes((1, odim))
                    + _padded_tile_bytes((4 * odim, odim)))
    out_blk = _padded_tile_bytes((1, b_tile))
    vmem_need = 2 * (2 * seq_blk) + 2 * weight_bytes + 2 * out_blk
    vmem_limit = int(min(max(4 * vmem_need, 16 << 20), 48 << 20))

    const_spec = lambda shape: pl.BlockSpec(shape, lambda b: (0, 0))

    out = pl.pallas_call(
        functools.partial(phrase_sim_kernel, odim=odim),
        out_shape=jax.ShapeDtypeStruct((1, B), jnp.float32),
        grid=(num_blocks,),
        in_specs=[
            pl.BlockSpec((L, b_tile, idim), lambda b: (0, b, 0)),   # seq1
            pl.BlockSpec((L, b_tile, idim), lambda b: (0, b, 0)),   # seq2
            const_spec((idim, odim)),                               # wenc (pre-scaled)
            const_spec((1, odim)),                                  # benc
            const_spec((4 * odim, odim)),                           # w1
            const_spec((1, odim)),                                  # b1
            const_spec((1, odim)),                                  # w2 row
            pl.BlockSpec(memory_space=pltpu.MemorySpace.SMEM),      # b2 scalar
        ],
        out_specs=pl.BlockSpec((1, b_tile), lambda b: (0, b)),
        compiler_params=pltpu.CompilerParams(
            dimension_semantics=("parallel",),
            vmem_limit_bytes=vmem_limit),
    )(seq1, seq2, wenc_scaled, benc, w1, b1, w2_row, b2_s)

    return out.reshape(B, 1)


def xavier_uniform(key, fan_in, fan_out):
    limit = (6.0 / (fan_in + fan_out)) ** 0.5
    return jax.random.uniform(key, (fan_in, fan_out), jnp.float32, -limit, limit)


def init_params(key, idim, odim):
    k0, k1, k2 = jax.random.split(key, 3)
    return {
        "wenc": xavier_uniform(k0, idim, odim),
        "benc": jnp.zeros((1, odim), jnp.float32),
        "w1":   xavier_uniform(k1, 4 * odim, odim),
        "b1":   jnp.zeros((1, odim), jnp.float32),
        "w2":   xavier_uniform(k2, odim, 1),
        "b2":   jnp.zeros((1, 1), jnp.float32),
    }


def phrase_sim_ref(seq1, seq2, p):
    """Pure-JAX reference for correctness checking."""
    h1 = jnp.tanh(jnp.mean(seq1, 0) @ p["wenc"] + p["benc"])
    h2 = jnp.tanh(jnp.mean(seq2, 0) @ p["wenc"] + p["benc"])
    cat = jnp.concatenate([h1, h2, jnp.abs(h1 - h2), h1 * h2], axis=1)
    z = jnp.maximum(cat @ p["w1"] + p["b1"], 0.0)
    return jax.nn.sigmoid(z @ p["w2"] + p["b2"])


if __name__ == "__main__":
    L, B, IDIM, ODIM = 8, 8, 16, 32

    key = jax.random.PRNGKey(0)
    kp, ks1, ks2 = jax.random.split(key, 3)
    params = init_params(kp, IDIM, ODIM)
    seq1 = jax.random.normal(ks1, (L, B, IDIM), jnp.float32)
    seq2 = jax.random.normal(ks2, (L, B, IDIM), jnp.float32)

    probs = phrase_sim(seq1, seq2, params)
    jax.block_until_ready(probs)

    expected = phrase_sim_ref(seq1, seq2, params)
    assert probs.shape == (B, 1)
    assert jnp.allclose(probs, expected, atol=1e-5, rtol=1e-5)

    print("KERNEL_OK")
</pallas_src>

<mosaic_0001>
module attributes {stable_mosaic.version = 11 : i64} {
  func.func @phrase_sim_kernel(%arg0: i32, %arg1: memref<8x8x16xf32, #tpu.memory_space<vmem>>, %arg2: memref<8x8x16xf32, #tpu.memory_space<vmem>>, %arg3: memref<16x32xf32, #tpu.memory_space<vmem>>, %arg4: memref<1x32xf32, #tpu.memory_space<vmem>>, %arg5: memref<128x32xf32, #tpu.memory_space<vmem>>, %arg6: memref<1x32xf32, #tpu.memory_space<vmem>>, %arg7: memref<1x32xf32, #tpu.memory_space<vmem>>, %arg8: memref<1xf32, #tpu.memory_space<smem>>, %arg9: memref<1x8xf32, #tpu.memory_space<vmem>>) attributes {dimension_semantics = [#tpu.dimension_semantics<parallel>], iteration_bounds = array<i64: 1>, scalar_prefetch = 0 : i64, scratch_operands = 0 : i64, tpu.core_type = #tpu.core_type<tc>, window_params = [{transform_indices = @transform_0, window_bounds = array<i64: 8, 8, 16>}, {transform_indices = @transform_1, window_bounds = array<i64: 8, 8, 16>}, {pipeline_mode = #tpu.pipeline_mode<synchronous>, transform_indices = @transform_2, window_bounds = array<i64: 16, 32>}, {pipeline_mode = #tpu.pipeline_mode<synchronous>, transform_indices = @transform_3, window_bounds = array<i64: 1, 32>}, {pipeline_mode = #tpu.pipeline_mode<synchronous>, transform_indices = @transform_4, window_bounds = array<i64: 128, 32>}, {pipeline_mode = #tpu.pipeline_mode<synchronous>, transform_indices = @transform_5, window_bounds = array<i64: 1, 32>}, {pipeline_mode = #tpu.pipeline_mode<synchronous>, transform_indices = @transform_6, window_bounds = array<i64: 1, 32>}, {transform_indices = @transform_7, window_bounds = array<i64: 1>}, {transform_indices = @transform_8, window_bounds = array<i64: 1, 8>}]} {
    %c0 = arith.constant 0 : index
    %c0_0 = arith.constant 0 : index
    %c0_1 = arith.constant 0 : index
    %0 = vector.load %arg1[%c0, %c0_0, %c0_1] : memref<8x8x16xf32, #tpu.memory_space<vmem>>, vector<8x8x16xf32>
    %c0_2 = arith.constant 0 : index
    %c0_3 = arith.constant 0 : index
    %c0_4 = arith.constant 0 : index
    %1 = vector.load %arg2[%c0_2, %c0_3, %c0_4] : memref<8x8x16xf32, #tpu.memory_space<vmem>>, vector<8x8x16xf32>
    %cst = arith.constant dense<0.000000e+00> : vector<8x16xf32>
    %2 = vector.multi_reduction <add>, %0, %cst [0] : vector<8x8x16xf32> to vector<8x16xf32>
    %cst_5 = arith.constant dense<0.000000e+00> : vector<8x16xf32>
    %3 = vector.multi_reduction <add>, %1, %cst_5 [0] : vector<8x8x16xf32> to vector<8x16xf32>
    %c0_6 = arith.constant 0 : index
    %c0_7 = arith.constant 0 : index
    %4 = vector.load %arg3[%c0_6, %c0_7] : memref<16x32xf32, #tpu.memory_space<vmem>>, vector<16x32xf32>
    %c0_8 = arith.constant 0 : index
    %c0_9 = arith.constant 0 : index
    %5 = vector.load %arg4[%c0_8, %c0_9] : memref<1x32xf32, #tpu.memory_space<vmem>>, vector<1x32xf32>
    %cst_10 = arith.constant dense<0.000000e+00> : vector<8x32xf32>
    %6 = tpu.matmul %2, %4, %cst_10 {dimension_numbers = #tpu.dot_dimension_numbers<[1], [0], [0], [1], [0, 0, 1, 1], [], []>} : vector<8x16xf32>, vector<16x32xf32>, vector<8x32xf32> -> vector<8x32xf32>
    %7 = vector.broadcast %5 : vector<1x32xf32> to vector<8x32xf32>
    %8 = arith.addf %6, %7 : vector<8x32xf32>
    %9 = math.tanh %8 : vector<8x32xf32>
    %cst_11 = arith.constant dense<0.000000e+00> : vector<8x32xf32>
    %10 = tpu.matmul %3, %4, %cst_11 {dimension_numbers = #tpu.dot_dimension_numbers<[1], [0], [0], [1], [0, 0, 1, 1], [], []>} : vector<8x16xf32>, vector<16x32xf32>, vector<8x32xf32> -> vector<8x32xf32>
    %11 = vector.broadcast %5 : vector<1x32xf32> to vector<8x32xf32>
    %12 = arith.addf %10, %11 : vector<8x32xf32>
    %13 = math.tanh %12 : vector<8x32xf32>
    %c0_12 = arith.constant 0 : index
    %c0_13 = arith.constant 0 : index
    %14 = vector.load %arg5[%c0_12, %c0_13] : memref<128x32xf32, #tpu.memory_space<vmem>>, vector<32x32xf32>
    %c32 = arith.constant 32 : index
    %c0_14 = arith.constant 0 : index
    %15 = vector.load %arg5[%c32, %c0_14] : memref<128x32xf32, #tpu.memory_space<vmem>>, vector<32x32xf32>
    %c64 = arith.constant 64 : index
    %c0_15 = arith.constant 0 : index
    %16 = vector.load %arg5[%c64, %c0_15] : memref<128x32xf32, #tpu.memory_space<vmem>>, vector<32x32xf32>
    %c96 = arith.constant 96 : index
    %c0_16 = arith.constant 0 : index
    %17 = vector.load %arg5[%c96, %c0_16] : memref<128x32xf32, #tpu.memory_space<vmem>>, vector<32x32xf32>
    %cst_17 = arith.constant dense<0.000000e+00> : vector<8x32xf32>
    %18 = tpu.matmul %9, %14, %cst_17 {dimension_numbers = #tpu.dot_dimension_numbers<[1], [0], [0], [1], [0, 0, 1, 1], [], []>} : vector<8x32xf32>, vector<32x32xf32>, vector<8x32xf32> -> vector<8x32xf32>
    %cst_18 = arith.constant dense<0.000000e+00> : vector<8x32xf32>
    %19 = tpu.matmul %13, %15, %cst_18 {dimension_numbers = #tpu.dot_dimension_numbers<[1], [0], [0], [1], [0, 0, 1, 1], [], []>} : vector<8x32xf32>, vector<32x32xf32>, vector<8x32xf32> -> vector<8x32xf32>
    %20 = arith.addf %18, %19 : vector<8x32xf32>
    %21 = arith.subf %9, %13 : vector<8x32xf32>
    %22 = math.absf %21 : vector<8x32xf32>
    %cst_19 = arith.constant dense<0.000000e+00> : vector<8x32xf32>
    %23 = tpu.matmul %22, %16, %cst_19 {dimension_numbers = #tpu.dot_dimension_numbers<[1], [0], [0], [1], [0, 0, 1, 1], [], []>} : vector<8x32xf32>, vector<32x32xf32>, vector<8x32xf32> -> vector<8x32xf32>
    %24 = arith.addf %20, %23 : vector<8x32xf32>
    %25 = arith.mulf %9, %13 : vector<8x32xf32>
    %cst_20 = arith.constant dense<0.000000e+00> : vector<8x32xf32>
    %26 = tpu.matmul %25, %17, %cst_20 {dimension_numbers = #tpu.dot_dimension_numbers<[1], [0], [0], [1], [0, 0, 1, 1], [], []>} : vector<8x32xf32>, vector<32x32xf32>, vector<8x32xf32> -> vector<8x32xf32>
    %27 = arith.addf %24, %26 : vector<8x32xf32>
    %c0_21 = arith.constant 0 : index
    %c0_22 = arith.constant 0 : index
    %28 = vector.load %arg6[%c0_21, %c0_22] : memref<1x32xf32, #tpu.memory_space<vmem>>, vector<1x32xf32>
    %29 = vector.broadcast %28 : vector<1x32xf32> to vector<8x32xf32>
    %30 = arith.addf %27, %29 : vector<8x32xf32>
    %cst_23 = arith.constant 0.000000e+00 : f32
    %31 = vector.broadcast %cst_23 : f32 to vector<8x32xf32>
    %32 = arith.maximumf %30, %31 : vector<8x32xf32>
    %c0_24 = arith.constant 0 : index
    %c0_25 = arith.constant 0 : index
    %33 = vector.load %arg7[%c0_24, %c0_25] : memref<1x32xf32, #tpu.memory_space<vmem>>, vector<1x32xf32>
    %34 = vector.broadcast %33 : vector<1x32xf32> to vector<8x32xf32>
    %35 = arith.mulf %32, %34 : vector<8x32xf32>
    %cst_26 = arith.constant dense<0.000000e+00> : vector<8xf32>
    %36 = vector.multi_reduction <add>, %35, %cst_26 [1] : vector<8x32xf32> to vector<8xf32>
    %c0_27 = arith.constant 0 : index
    %37 = memref.load %arg8[%c0_27] : memref<1xf32, #tpu.memory_space<smem>>
    %38 = vector.broadcast %37 : f32 to vector<8xf32>
    %39 = arith.addf %36, %38 : vector<8xf32>
    %cst_28 = arith.constant 0.000000e+00 : f32
    %40 = vector.broadcast %cst_28 : f32 to vector<8xf32>
    %41 = arith.subf %40, %39 : vector<8xf32>
    %42 = math.exp %41 : vector<8xf32>
    %cst_29 = arith.constant 1.000000e+00 : f32
    %43 = vector.broadcast %cst_29 : f32 to vector<8xf32>
    %44 = arith.addf %43, %42 : vector<8xf32>
    %cst_30 = arith.constant 1.000000e+00 : f32
    %45 = vector.broadcast %cst_30 : f32 to vector<8xf32>
    %46 = arith.divf %45, %44 : vector<8xf32>
    %47 = vector.shape_cast %46 : vector<8xf32> to vector<1x8xf32>
    %c0_31 = arith.constant 0 : index
    %c0_32 = arith.constant 0 : index
    %48 = vector.load %arg9[%c0_31, %c0_32] : memref<1x8xf32, #tpu.memory_space<vmem>>, vector<1x8xf32>
    tpu.vector_store %arg9[%c0_31, %c0_32], %47 {strides = array<i32>} : memref<1x8xf32, #tpu.memory_space<vmem>>, vector<1x8xf32>,
    return
  }
  func.func @transform_0(%arg0: i32) -> (i32, i32, i32) {
    %c0_i32 = arith.constant 0 : i32
    %c0_i32_0 = arith.constant 0 : i32
    %c0_i32_1 = arith.constant 0 : i32
    return %c0_i32, %arg0, %c0_i32_0 : i32, i32, i32
  }
  func.func @transform_1(%arg0: i32) -> (i32, i32, i32) {
    %c0_i32 = arith.constant 0 : i32
    %c0_i32_0 = arith.constant 0 : i32
    %c0_i32_1 = arith.constant 0 : i32
    return %c0_i32, %arg0, %c0_i32_0 : i32, i32, i32
  }
  func.func @transform_2(%arg0: i32) -> (i32, i32) {
    %c0_i32 = arith.constant 0 : i32
    %c0_i32_0 = arith.constant 0 : i32
    %c0_i32_1 = arith.constant 0 : i32
    return %c0_i32, %c0_i32_0 : i32, i32
  }
  func.func @transform_3(%arg0: i32) -> (i32, i32) {
    %c0_i32 = arith.constant 0 : i32
    %c0_i32_0 = arith.constant 0 : i32
    %c0_i32_1 = arith.constant 0 : i32
    return %c0_i32, %c0_i32_0 : i32, i32
  }
  func.func @transform_4(%arg0: i32) -> (i32, i32) {
    %c0_i32 = arith.constant 0 : i32
    %c0_i32_0 = arith.constant 0 : i32
    %c0_i32_1 = arith.constant 0 : i32
    return %c0_i32, %c0_i32_0 : i32, i32
  }
  func.func @transform_5(%arg0: i32) -> (i32, i32) {
    %c0_i32 = arith.constant 0 : i32
    %c0_i32_0 = arith.constant 0 : i32
    %c0_i32_1 = arith.constant 0 : i32
    return %c0_i32, %c0_i32_0 : i32, i32
  }
  func.func @transform_6(%arg0: i32) -> (i32, i32) {
    %c0_i32 = arith.constant 0 : i32
    %c0_i32_0 = arith.constant 0 : i32
    %c0_i32_1 = arith.constant 0 : i32
    return %c0_i32, %c0_i32_0 : i32, i32
  }
  func.func @transform_7(%arg0: i32) -> i32 {
    %c0_i32 = arith.constant 0 : i32
    %c0_i32_0 = arith.constant 0 : i32
    return %c0_i32 : i32
  }
  func.func @transform_8(%arg0: i32) -> (i32, i32) {
    %c0_i32 = arith.constant 0 : i32
    %c0_i32_0 = arith.constant 0 : i32
    return %c0_i32, %arg0 : i32, i32
  }
}

</mosaic_0001>

<llo_original>
// kernel: tpu_custom_call.1
$region0: #{tpu_custom_call.1}
  #allocation0 [shape = 'u32[]', space=smem, size = 0x4, offset = 0x4, fixed_abs, tag = 'smem constant byte address 0x4 - core index']
  #allocation1 [shape = 'u32[144,128]{1,0:T(1,128)}', space=vmem, size = 0x12000, scoped, tag = 'internal scratch']
  #allocation2 [shape = 'f32[1]{0:T(128)S(6)}', space=smem, size = 0x200, scoped, tag = 'scoped memory for tpu_custom_call.1']
  %s0 = inlined_call_operand.vmem [shape: f32[8,8,16], index: 0, kind: input, shape index: {}]
  %s1 = inlined_call_operand.vmem [shape: f32[8,8,16], index: 1, kind: input, shape index: {}]
  %s2 = inlined_call_operand.vmem [shape: f32[16,32], index: 2, kind: input, shape index: {}]
  %s3 = inlined_call_operand.vmem [shape: f32[1,32], index: 3, kind: input, shape index: {}]
  %s4 = inlined_call_operand.vmem [shape: f32[128,32], index: 4, kind: input, shape index: {}]
  %s5 = inlined_call_operand.vmem [shape: f32[1,32], index: 5, kind: input, shape index: {}]
  %s6 = inlined_call_operand.vmem [shape: f32[1,32], index: 6, kind: input, shape index: {}]
  %s7 = inlined_call_operand.<no memory space> [shape: f32[1], index: 7, kind: input, shape index: {}]
  %s8 = inlined_call_operand.hbm [shape: f32[1,8], index: 8, kind: output, shape index: {}]
  %s9 = sld [smem:[#allocation0]]
  $region42: #{tpu_custom_call.1} parent=0
    _
  %s11 = ssub.s32 1, %s9
  %s12 = scalar_select 0, %s11, %s9
  %13 = sst [smem:[#allocation2]] %s7
  $region1: #{tpu_custom_call.1} parent=0
    #allocation3 [shape = 'u8[512]{0}', space=vmem, size = 0x400, scoped, tag = 'output window, operand 0, single buffered']
    #allocation4 [shape = 's32[1]{0}', space=sflag, size = 0x4, scoped, tag = 'scoped memory for tpu_custom_call.1']
    %14 = vsyncpa [#allocation4], 0
    // Predicated region
    $region2: #{tpu_custom_call.1} parent=1 // pred_check
      _
    $region3: #{tpu_custom_call.1} parent=1 // pred_check_branch
      %16 = sbr.rel (0) target = $region5
    $region4: #{tpu_custom_call.1} parent=1 // pred_region
      _
    $region5: #{tpu_custom_call.1} parent=1 // pred_fallthru
      _
    // Predicated region
    $region6: #{tpu_custom_call.1} parent=1 // pred_check
      _
    $region7: #{tpu_custom_call.1} parent=1 // pred_check_branch
      %18 = sbr.rel (0) target = $region9
    $region8: #{tpu_custom_call.1} parent=1 // pred_region
      _
    $region9: #{tpu_custom_call.1} parent=1 // pred_fallthru
      _
    // Predicated region
    $region10: #{tpu_custom_call.1} parent=1 // pred_check
      _
    $region11: #{tpu_custom_call.1} parent=1 // pred_check_branch
      %20 = sbr.rel (0) target = $region13
    $region12: #{tpu_custom_call.1} parent=1 // pred_region
      _
    $region13: #{tpu_custom_call.1} parent=1 // pred_fallthru
      _
    // Predicated region
    $region14: #{tpu_custom_call.1} parent=1 // pred_check
      _
    $region15: #{tpu_custom_call.1} parent=1 // pred_check_branch
      %22 = sbr.rel (0) target = $region17
    $region16: #{tpu_custom_call.1} parent=1 // pred_region
      _
    $region17: #{tpu_custom_call.1} parent=1 // pred_fallthru
      _
    // Predicated region
    $region18: #{tpu_custom_call.1} parent=1 // pred_check
      _
    $region19: #{tpu_custom_call.1} parent=1 // pred_check_branch
      %24 = sbr.rel (0) target = $region21
    $region20: #{tpu_custom_call.1} parent=1 // pred_region
      _
    $region21: #{tpu_custom_call.1} parent=1 // pred_fallthru
      _
    // Predicated region
    $region22: #{tpu_custom_call.1} parent=1 // pred_check
      _
    $region23: #{tpu_custom_call.1} parent=1 // pred_check_branch
      %26 = sbr.rel (0) target = $region25
    $region24: #{tpu_custom_call.1} parent=1 // pred_region
      _
    $region25: #{tpu_custom_call.1} parent=1 // pred_fallthru
      _
    // Predicated region
    $region26: #{tpu_custom_call.1} parent=1 // pred_check
      _
    $region27: #{tpu_custom_call.1} parent=1 // pred_check_branch
      %28 = sbr.rel (0) target = $region29
    $region28: #{tpu_custom_call.1} parent=1 // pred_region
      _
    $region29: #{tpu_custom_call.1} parent=1 // pred_fallthru
      _
    // Predicated region
    $region30: #{tpu_custom_call.1} parent=1 // pred_check
      _
    $region31: #{tpu_custom_call.1} parent=1 // pred_check_branch
      %30 = sbr.rel (0) target = $region33
    $region32: #{tpu_custom_call.1} parent=1 // pred_region
      _
    $region33: #{tpu_custom_call.1} parent=1 // pred_fallthru
      _
    %v31 = vld [vmem:[%s0] sm:$0xff]
    %v32 = vld [vmem:[%s0 + $0x8] sm:$0xff]
    %v33 = vld [vmem:[%s0 + $0x10] sm:$0xff]
    %v34 = vld [vmem:[%s0 + $0x18] sm:$0xff]
    %v35 = vld [vmem:[%s0 + $0x20] sm:$0xff]
    %v36 = vld [vmem:[%s0 + $0x28] sm:$0xff]
    %v37 = vld [vmem:[%s0 + $0x30] sm:$0xff]
    %v38 = vld [vmem:[%s0 + $0x38] sm:$0xff]
    %v39 = vld [vmem:[%s1] sm:$0xff]
    %v40 = vld [vmem:[%s1 + $0x8] sm:$0xff]
    %v41 = vld [vmem:[%s1 + $0x10] sm:$0xff]
    %v42 = vld [vmem:[%s1 + $0x18] sm:$0xff]
    %v43 = vld [vmem:[%s1 + $0x20] sm:$0xff]
    %v44 = vld [vmem:[%s1 + $0x28] sm:$0xff]
    %v45 = vld [vmem:[%s1 + $0x30] sm:$0xff]
    %v46 = vld [vmem:[%s1 + $0x38] sm:$0xff]
    %vm47 = vcmask 130048
    %v48 = vsel %vm47, %v31, 0.0
    %v49 = vsel %vm47, %v32, 0.0
    %v50 = vadd.f32 %v48, %v49
    %v51 = vsel %vm47, %v33, 0.0
    %v52 = vadd.f32 %v50, %v51
    %v53 = vsel %vm47, %v34, 0.0
    %v54 = vadd.f32 %v52, %v53
    %v55 = vsel %vm47, %v35, 0.0
    %v56 = vadd.f32 %v54, %v55
    %v57 = vsel %vm47, %v36, 0.0
    %v58 = vadd.f32 %v56, %v57
    %v59 = vsel %vm47, %v37, 0.0
    %v60 = vadd.f32 %v58, %v59
    %v61 = vsel %vm47, %v38, 0.0
    %v62 = vadd.f32 %v60, %v61
    %v63 = vsel %vm47, %v39, 0.0
    %v64 = vsel %vm47, %v40, 0.0
    %v65 = vadd.f32 %v63, %v64
    %v66 = vsel %vm47, %v41, 0.0
    %v67 = vadd.f32 %v65, %v66
    %v68 = vsel %vm47, %v42, 0.0
    %v69 = vadd.f32 %v67, %v68
    %v70 = vsel %vm47, %v43, 0.0
    %v71 = vadd.f32 %v69, %v70
    %v72 = vsel %vm47, %v44, 0.0
    %v73 = vadd.f32 %v71, %v72
    %v74 = vsel %vm47, %v45, 0.0
    %v75 = vadd.f32 %v73, %v74
    %v76 = vsel %vm47, %v46, 0.0
    %v77 = vadd.f32 %v75, %v76
    %v78 = vld [vmem:[%s2] sm:$0xff]
    %v79 = vld [vmem:[%s2 + $0x8] sm:$0xff]
    %v80 = vld [vmem:[%s3] sm:$0x1]
    %v82 = vlaneseq
    %v83 = vshrl.u32 %v82, 7
    %v84 = vsub.s32 0, %v83
    %v85 = vrot.slane %v80, %v84
    %v88 = vsel %vm47, %v62, 0
    %90 = vmatprep.subr.mxu0 0.0
    %91 = vmatpush1.msra.mxu0 %v78
    %92 = vmatprep.subr.mxu0 0.0
    %93 = vmatpush1.msra.mxu0 %v79
    %94 = vmatprep.subr.mxu0 0.0
    %95 = vmatpush1.msra.mxu0 0.0
    %96 = vmatprep.subr.mxu0 0.0
    %97 = vmatpush1.msra.mxu0 0.0
    %98 = vmatprep.subr.mxu0 0.0
    %99 = vmatpush1.msra.mxu0 0.0
    %100 = vmatprep.subr.mxu0 0.0
    %101 = vmatpush1.msra.mxu0 0.0
    %102 = vmatprep.subr.mxu0 0.0
    %103 = vmatpush1.msra.mxu0 0.0
    %104 = vmatprep.subr.mxu0 0.0
    %105 = vmatpush1.msra.mxu0 0.0
    %106 = vmatprep.subr.mxu0 0.0
    %107 = vmatpush1.msra.mxu0 0.0
    %108 = vmatprep.subr.mxu0 0.0
    %109 = vmatpush1.msra.mxu0 0.0
    %110 = vmatprep.subr.mxu0 0.0
    %111 = vmatpush1.msra.mxu0 0.0
    %112 = vmatprep.subr.mxu0 0.0
    %113 = vmatpush1.msra.mxu0 0.0
    %114 = vmatprep.subr.mxu0 0.0
    %115 = vmatpush1.msra.mxu0 0.0
    %116 = vmatprep.subr.mxu0 0.0
    %117 = vmatpush1.msra.mxu0 0.0
    %118 = vmatprep.subr.mxu0 0.0
    %119 = vmatpush1.msra.mxu0 0.0
    %120 = vmatprep.subr.mxu0 0.0
    %121 = vmatpush1.msra.mxu0 0.0
    %122 = vmatprep.subr.mxu0 0.0
    %123 = vmatpush1.msra.mxu0 0.0
    %124 = vmatprep.subr.mxu0 0.0
    %125 = vmatpush1.msra.mxu0 0.0
    %126 = vmatprep.subr.mxu0 0.0
    %127 = vmatpush1.msra.mxu0 0.0
    %128 = vmatprep.subr.mxu0 0.0
    %129 = vmatpush1.msra.mxu0 0.0
    %130 = vmatprep.subr.mxu0 0.0
    %131 = vmatpush1.msra.mxu0 0.0
    %132 = vmatprep.subr.mxu0 0.0
    %133 = vmatpush1.msra.mxu0 0.0
    %134 = vmatprep.subr.mxu0 0.0
    %135 = vmatpush1.msra.mxu0 0.0
    %136 = vmatprep.subr.mxu0 0.0
    %137 = vmatpush1.msra.mxu0 0.0
    %138 = vmatprep.subr.mxu0 0.0
    %139 = vmatpush1.msra.mxu0 0.0
    %140 = vmatprep.subr.mxu0 0.0
    %141 = vmatpush1.msra.mxu0 0.0
    %142 = vmatprep.subr.mxu0 0.0
    %143 = vmatpush1.msra.mxu0 0.0
    %144 = vmatprep.subr.mxu0 0.0
    %145 = vmatpush1.msra.mxu0 0.0
    %146 = vmatprep.subr.mxu0 0.0
    %147 = vmatpush1.msra.mxu0 0.0
    %148 = vmatprep.subr.mxu0 0.0
    %149 = vmatpush1.msra.mxu0 0.0
    %150 = vmatprep.subr.mxu0 0.0
    %151 = vmatpush1.msra.mxu0 0.0
    %152 = vmatprep.subr.mxu0 0.0
    %153 = vmatpush1.msra.mxu0 0.0
    %154 = vmatprep.mubr.f32.mxu0 0.0
    %155 = vmatmul.mubr.f32.gmra.mrb[0].mxu0 %v88
    %v156 = vpop.f32.mrb[0].mxu0
    %v157 = vadd.f32 %v85, %v156
    %v158 = vpop.f32.mrb[0].mxu0
    %159 = vdwg.mxu0
    %v160 = vtanh.pop %v157
    %v162 = vsel %vm47, %v77, 0
    %164 = vmatprep.subr.mxu0 0.0
    %165 = vmatpush1.msra.mxu0 %v78
    %166 = vmatprep.subr.mxu0 0.0
    %167 = vmatpush1.msra.mxu0 %v79
    %168 = vmatprep.subr.mxu0 0.0
    %169 = vmatpush1.msra.mxu0 0.0
    %170 = vmatprep.subr.mxu0 0.0
    %171 = vmatpush1.msra.mxu0 0.0
    %172 = vmatprep.subr.mxu0 0.0
    %173 = vmatpush1.msra.mxu0 0.0
    %174 = vmatprep.subr.mxu0 0.0
    %175 = vmatpush1.msra.mxu0 0.0
    %176 = vmatprep.subr.mxu0 0.0
    %177 = vmatpush1.msra.mxu0 0.0
    %178 = vmatprep.subr.mxu0 0.0
    %179 = vmatpush1.msra.mxu0 0.0
    %180 = vmatprep.subr.mxu0 0.0
    %181 = vmatpush1.msra.mxu0 0.0
    %182 = vmatprep.subr.mxu0 0.0
    %183 = vmatpush1.msra.mxu0 0.0
    %184 = vmatprep.subr.mxu0 0.0
    %185 = vmatpush1.msra.mxu0 0.0
    %186 = vmatprep.subr.mxu0 0.0
    %187 = vmatpush1.msra.mxu0 0.0
    %188 = vmatprep.subr.mxu0 0.0
    %189 = vmatpush1.msra.mxu0 0.0
    %190 = vmatprep.subr.mxu0 0.0
    %191 = vmatpush1.msra.mxu0 0.0
    %192 = vmatprep.subr.mxu0 0.0
    %193 = vmatpush1.msra.mxu0 0.0
    %194 = vmatprep.subr.mxu0 0.0
    %195 = vmatpush1.msra.mxu0 0.0
    %196 = vmatprep.subr.mxu0 0.0
    %197 = vmatpush1.msra.mxu0 0.0
    %198 = vmatprep.subr.mxu0 0.0
    %199 = vmatpush1.msra.mxu0 0.0
    %200 = vmatprep.subr.mxu0 0.0
    %201 = vmatpush1.msra.mxu0 0.0
    %202 = vmatprep.subr.mxu0 0.0
    %203 = vmatpush1.msra.mxu0 0.0
    %204 = vmatprep.subr.mxu0 0.0
    %205 = vmatpush1.msra.mxu0 0.0
    %206 = vmatprep.subr.mxu0 0.0
    %207 = vmatpush1.msra.mxu0 0.0
    %208 = vmatprep.subr.mxu0 0.0
    %209 = vmatpush1.msra.mxu0 0.0
    %210 = vmatprep.subr.mxu0 0.0
    %211 = vmatpush1.msra.mxu0 0.0
    %212 = vmatprep.subr.mxu0 0.0
    %213 = vmatpush1.msra.mxu0 0.0
    %214 = vmatprep.subr.mxu0 0.0
    %215 = vmatpush1.msra.mxu0 0.0
    %216 = vmatprep.subr.mxu0 0.0
    %217 = vmatpush1.msra.mxu0 0.0
    %218 = vmatprep.subr.mxu0 0.0
    %219 = vmatpush1.msra.mxu0 0.0
    %220 = vmatprep.subr.mxu0 0.0
    %221 = vmatpush1.msra.mxu0 0.0
    %222 = vmatprep.subr.mxu0 0.0
    %223 = vmatpush1.msra.mxu0 0.0
    %224 = vmatprep.subr.mxu0 0.0
    %225 = vmatpush1.msra.mxu0 0.0
    %226 = vmatprep.subr.mxu0 0.0
    %227 = vmatpush1.msra.mxu0 0.0
    %228 = vmatprep.mubr.f32.mxu0 0.0
    %229 = vmatmul.mubr.f32.gmra.mrb[0].mxu0 %v162
    %v230 = vpop.f32.mrb[0].mxu0
    %v231 = vadd.f32 %v85, %v230
    %v232 = vpop.f32.mrb[0].mxu0
    %233 = vdwg.mxu0
    %v234 = vtanh.pop %v231
    %v235 = vld [vmem:[%s4] sm:$0xff]
    %v236 = vld [vmem:[%s4 + $0x8] sm:$0xff]
    %v237 = vld [vmem:[%s4 + $0x10] sm:$0xff]
    %v238 = vld [vmem:[%s4 + $0x18] sm:$0xff]
    %v239 = vld [vmem:[%s4 + $0x20] sm:$0xff]
    %v240 = vld [vmem:[%s4 + $0x28] sm:$0xff]
    %v241 = vld [vmem:[%s4 + $0x30] sm:$0xff]
    %v242 = vld [vmem:[%s4 + $0x38] sm:$0xff]
    %v243 = vld [vmem:[%s4 + $0x40] sm:$0xff]
    %v244 = vld [vmem:[%s4 + $0x48] sm:$0xff]
    %v245 = vld [vmem:[%s4 + $0x50] sm:$0xff]
    %v246 = vld [vmem:[%s4 + $0x58] sm:$0xff]
    %v247 = vld [vmem:[%s4 + $0x60] sm:$0xff]
    %v248 = vld [vmem:[%s4 + $0x68] sm:$0xff]
    %v249 = vld [vmem:[%s4 + $0x70] sm:$0xff]
    %v250 = vld [vmem:[%s4 + $0x78] sm:$0xff]
    %vm251 = vcmask 261120
    %v253 = vsel %vm251, %v234, 0
    %255 = vmatprep.subr.mxu0 0.0
    %256 = vmatpush1.msra.mxu0 %v239
    %257 = vmatprep.subr.mxu0 0.0
    %258 = vmatpush1.msra.mxu0 %v240
    %259 = vmatprep.subr.mxu0 0.0
    %260 = vmatpush1.msra.mxu0 %v241
    %261 = vmatprep.subr.mxu0 0.0
    %262 = vmatpush1.msra.mxu0 %v242
    %263 = vmatprep.subr.mxu0 0.0
    %264 = vmatpush1.msra.mxu0 0.0
    %265 = vmatprep.subr.mxu0 0.0
    %266 = vmatpush1.msra.mxu0 0.0
    %267 = vmatprep.subr.mxu0 0.0
    %268 = vmatpush1.msra.mxu0 0.0
    %269 = vmatprep.subr.mxu0 0.0
    %270 = vmatpush1.msra.mxu0 0.0
    %271 = vmatprep.subr.mxu0 0.0
    %272 = vmatpush1.msra.mxu0 0.0
    %273 = vmatprep.subr.mxu0 0.0
    %274 = vmatpush1.msra.mxu0 0.0
    %275 = vmatprep.subr.mxu0 0.0
    %276 = vmatpush1.msra.mxu0 0.0
    %277 = vmatprep.subr.mxu0 0.0
    %278 = vmatpush1.msra.mxu0 0.0
    %279 = vmatprep.subr.mxu0 0.0
    %280 = vmatpush1.msra.mxu0 0.0
    %281 = vmatprep.subr.mxu0 0.0
    %282 = vmatpush1.msra.mxu0 0.0
    %283 = vmatprep.subr.mxu0 0.0
    %284 = vmatpush1.msra.mxu0 0.0
    %285 = vmatprep.subr.mxu0 0.0
    %286 = vmatpush1.msra.mxu0 0.0
    %287 = vmatprep.subr.mxu0 0.0
    %288 = vmatpush1.msra.mxu0 0.0
    %289 = vmatprep.subr.mxu0 0.0
    %290 = vmatpush1.msra.mxu0 0.0
    %291 = vmatprep.subr.mxu0 0.0
    %292 = vmatpush1.msra.mxu0 0.0
    %293 = vmatprep.subr.mxu0 0.0
    %294 = vmatpush1.msra.mxu0 0.0
    %295 = vmatprep.subr.mxu0 0.0
    %296 = vmatpush1.msra.mxu0 0.0
    %297 = vmatprep.subr.mxu0 0.0
    %298 = vmatpush1.msra.mxu0 0.0
    %299 = vmatprep.subr.mxu0 0.0
    %300 = vmatpush1.msra.mxu0 0.0
    %301 = vmatprep.subr.mxu0 0.0
    %302 = vmatpush1.msra.mxu0 0.0
    %303 = vmatprep.subr.mxu0 0.0
    %304 = vmatpush1.msra.mxu0 0.0
    %305 = vmatprep.subr.mxu0 0.0
    %306 = vmatpush1.msra.mxu0 0.0
    %307 = vmatprep.subr.mxu0 0.0
    %308 = vmatpush1.msra.mxu0 0.0
    %309 = vmatprep.subr.mxu0 0.0
    %310 = vmatpush1.msra.mxu0 0.0
    %311 = vmatprep.subr.mxu0 0.0
    %312 = vmatpush1.msra.mxu0 0.0
    %313 = vmatprep.subr.mxu0 0.0
    %314 = vmatpush1.msra.mxu0 0.0
    %315 = vmatprep.subr.mxu0 0.0
    %316 = vmatpush1.msra.mxu0 0.0
    %317 = vmatprep.subr.mxu0 0.0
    %318 = vmatpush1.msra.mxu0 0.0
    %319 = vmatprep.mubr.f32.mxu0 0.0
    %320 = vmatmul.mubr.f32.gmra.mrb[0].mxu0 %v253
    %v321 = vpop.f32.mrb[0].mxu0
    %v322 = vadd.f32 0.0, %v321
    %v323 = vpop.f32.mrb[0].mxu0
    %324 = vdwg.mxu0
    %v326 = vsel %vm251, %v160, 0
    %328 = vmatprep.subr.mxu0 0.0
    %329 = vmatpush1.msra.mxu0 %v235
    %330 = vmatprep.subr.mxu0 0.0
    %331 = vmatpush1.msra.mxu0 %v236
    %332 = vmatprep.subr.mxu0 0.0
    %333 = vmatpush1.msra.mxu0 %v237
    %334 = vmatprep.subr.mxu0 0.0
    %335 = vmatpush1.msra.mxu0 %v238
    %336 = vmatprep.subr.mxu0 0.0
    %337 = vmatpush1.msra.mxu0 0.0
    %338 = vmatprep.subr.mxu0 0.0
    %339 = vmatpush1.msra.mxu0 0.0
    %340 = vmatprep.subr.mxu0 0.0
    %341 = vmatpush1.msra.mxu0 0.0
    %342 = vmatprep.subr.mxu0 0.0
    %343 = vmatpush1.msra.mxu0 0.0
    %344 = vmatprep.subr.mxu0 0.0
    %345 = vmatpush1.msra.mxu0 0.0
    %346 = vmatprep.subr.mxu0 0.0
    %347 = vmatpush1.msra.mxu0 0.0
    %348 = vmatprep.subr.mxu0 0.0
    %349 = vmatpush1.msra.mxu0 0.0
    %350 = vmatprep.subr.mxu0 0.0
    %351 = vmatpush1.msra.mxu0 0.0
    %352 = vmatprep.subr.mxu0 0.0
    %353 = vmatpush1.msra.mxu0 0.0
    %354 = vmatprep.subr.mxu0 0.0
    %355 = vmatpush1.msra.mxu0 0.0
    %356 = vmatprep.subr.mxu0 0.0
    %357 = vmatpush1.msra.mxu0 0.0
    %358 = vmatprep.subr.mxu0 0.0
    %359 = vmatpush1.msra.mxu0 0.0
    %360 = vmatprep.subr.mxu0 0.0
    %361 = vmatpush1.msra.mxu0 0.0
    %362 = vmatprep.subr.mxu0 0.0
    %363 = vmatpush1.msra.mxu0 0.0
    %364 = vmatprep.subr.mxu0 0.0
    %365 = vmatpush1.msra.mxu0 0.0
    %366 = vmatprep.subr.mxu0 0.0
    %367 = vmatpush1.msra.mxu0 0.0
    %368 = vmatprep.subr.mxu0 0.0
    %369 = vmatpush1.msra.mxu0 0.0
    %370 = vmatprep.subr.mxu0 0.0
    %371 = vmatpush1.msra.mxu0 0.0
    %372 = vmatprep.subr.mxu0 0.0
    %373 = vmatpush1.msra.mxu0 0.0
    %374 = vmatprep.subr.mxu0 0.0
    %375 = vmatpush1.msra.mxu0 0.0
    %376 = vmatprep.subr.mxu0 0.0
    %377 = vmatpush1.msra.mxu0 0.0
    %378 = vmatprep.subr.mxu0 0.0
    %379 = vmatpush1.msra.mxu0 0.0
    %380 = vmatprep.subr.mxu0 0.0
    %381 = vmatpush1.msra.mxu0 0.0
    %382 = vmatprep.subr.mxu0 0.0
    %383 = vmatpush1.msra.mxu0 0.0
    %384 = vmatprep.subr.mxu0 0.0
    %385 = vmatpush1.msra.mxu0 0.0
    %386 = vmatprep.subr.mxu0 0.0
    %387 = vmatpush1.msra.mxu0 0.0
    %388 = vmatprep.subr.mxu0 0.0
    %389 = vmatpush1.msra.mxu0 0.0
    %390 = vmatprep.subr.mxu0 0.0
    %391 = vmatpush1.msra.mxu0 0.0
    %392 = vmatprep.mubr.f32.mxu0 0.0
    %393 = vmatmul.mubr.f32.gmra.mrb[0].mxu0 %v326
    %v394 = vpop.f32.mrb[0].mxu0
    %v395 = vadd.f32 %v322, %v394
    %v396 = vpop.f32.mrb[0].mxu0
    %397 = vdwg.mxu0
    %v398 = vsub.f32 %v160, %v234
    %v399 = vand.u32 2147483647, %v398
    %v401 = vsel %vm251, %v399, 0
    %403 = vmatprep.subr.mxu0 0.0
    %404 = vmatpush1.msra.mxu0 %v243
    %405 = vmatprep.subr.mxu0 0.0
    %406 = vmatpush1.msra.mxu0 %v244
    %407 = vmatprep.subr.mxu0 0.0
    %408 = vmatpush1.msra.mxu0 %v245
    %409 = vmatprep.subr.mxu0 0.0
    %410 = vmatpush1.msra.mxu0 %v246
    %411 = vmatprep.subr.mxu0 0.0
    %412 = vmatpush1.msra.mxu0 0.0
    %413 = vmatprep.subr.mxu0 0.0
    %414 = vmatpush1.msra.mxu0 0.0
    %415 = vmatprep.subr.mxu0 0.0
    %416 = vmatpush1.msra.mxu0 0.0
    %417 = vmatprep.subr.mxu0 0.0
    %418 = vmatpush1.msra.mxu0 0.0
    %419 = vmatprep.subr.mxu0 0.0
    %420 = vmatpush1.msra.mxu0 0.0
    %421 = vmatprep.subr.mxu0 0.0
    %422 = vmatpush1.msra.mxu0 0.0
    %423 = vmatprep.subr.mxu0 0.0
    %424 = vmatpush1.msra.mxu0 0.0
    %425 = vmatprep.subr.mxu0 0.0
    %426 = vmatpush1.msra.mxu0 0.0
    %427 = vmatprep.subr.mxu0 0.0
    %428 = vmatpush1.msra.mxu0 0.0
    %429 = vmatprep.subr.mxu0 0.0
    %430 = vmatpush1.msra.mxu0 0.0
    %431 = vmatprep.subr.mxu0 0.0
    %432 = vmatpush1.msra.mxu0 0.0
    %433 = vmatprep.subr.mxu0 0.0
    %434 = vmatpush1.msra.mxu0 0.0
    %435 = vmatprep.subr.mxu0 0.0
    %436 = vmatpush1.msra.mxu0 0.0
    %437 = vmatprep.subr.mxu0 0.0
    %438 = vmatpush1.msra.mxu0 0.0
    %439 = vmatprep.subr.mxu0 0.0
    %440 = vmatpush1.msra.mxu0 0.0
    %441 = vmatprep.subr.mxu0 0.0
    %442 = vmatpush1.msra.mxu0 0.0
    %443 = vmatprep.subr.mxu0 0.0
    %444 = vmatpush1.msra.mxu0 0.0
    %445 = vmatprep.subr.mxu0 0.0
    %446 = vmatpush1.msra.mxu0 0.0
    %447 = vmatprep.subr.mxu0 0.0
    %448 = vmatpush1.msra.mxu0 0.0
    %449 = vmatprep.subr.mxu0 0.0
    %450 = vmatpush1.msra.mxu0 0.0
    %451 = vmatprep.subr.mxu0 0.0
    %452 = vmatpush1.msra.mxu0 0.0
    %453 = vmatprep.subr.mxu0 0.0
    %454 = vmatpush1.msra.mxu0 0.0
    %455 = vmatprep.subr.mxu0 0.0
    %456 = vmatpush1.msra.mxu0 0.0
    %457 = vmatprep.subr.mxu0 0.0
    %458 = vmatpush1.msra.mxu0 0.0
    %459 = vmatprep.subr.mxu0 0.0
    %460 = vmatpush1.msra.mxu0 0.0
    %461 = vmatprep.subr.mxu0 0.0
    %462 = vmatpush1.msra.mxu0 0.0
    %463 = vmatprep.subr.mxu0 0.0
    %464 = vmatpush1.msra.mxu0 0.0
    %465 = vmatprep.subr.mxu0 0.0
    %466 = vmatpush1.msra.mxu0 0.0
    %467 = vmatprep.mubr.f32.mxu0 0.0
    %468 = vmatmul.mubr.f32.gmra.mrb[0].mxu0 %v401
    %v469 = vpop.f32.mrb[0].mxu0
    %v470 = vadd.f32 0.0, %v469
    %v471 = vpop.f32.mrb[0].mxu0
    %472 = vdwg.mxu0
    %v473 = vadd.f32 %v395, %v470
    %v474 = vmul.f32 %v160, %v234
    %v476 = vsel %vm251, %v474, 0
    %478 = vmatprep.subr.mxu0 0.0
    %479 = vmatpush1.msra.mxu0 %v247
    %480 = vmatprep.subr.mxu0 0.0
    %481 = vmatpush1.msra.mxu0 %v248
    %482 = vmatprep.subr.mxu0 0.0
    %483 = vmatpush1.msra.mxu0 %v249
    %484 = vmatprep.subr.mxu0 0.0
    %485 = vmatpush1.msra.mxu0 %v250
    %486 = vmatprep.subr.mxu0 0.0
    %487 = vmatpush1.msra.mxu0 0.0
    %488 = vmatprep.subr.mxu0 0.0
    %489 = vmatpush1.msra.mxu0 0.0
    %490 = vmatprep.subr.mxu0 0.0
    %491 = vmatpush1.msra.mxu0 0.0
    %492 = vmatprep.subr.mxu0 0.0
    %493 = vmatpush1.msra.mxu0 0.0
    %494 = vmatprep.subr.mxu0 0.0
    %495 = vmatpush1.msra.mxu0 0.0
    %496 = vmatprep.subr.mxu0 0.0
    %497 = vmatpush1.msra.mxu0 0.0
    %498 = vmatprep.subr.mxu0 0.0
    %499 = vmatpush1.msra.mxu0 0.0
    %500 = vmatprep.subr.mxu0 0.0
    %501 = vmatpush1.msra.mxu0 0.0
    %502 = vmatprep.subr.mxu0 0.0
    %503 = vmatpush1.msra.mxu0 0.0
    %504 = vmatprep.subr.mxu0 0.0
    %505 = vmatpush1.msra.mxu0 0.0
    %506 = vmatprep.subr.mxu0 0.0
    %507 = vmatpush1.msra.mxu0 0.0
    %508 = vmatprep.subr.mxu0 0.0
    %509 = vmatpush1.msra.mxu0 0.0
    %510 = vmatprep.subr.mxu0 0.0
    %511 = vmatpush1.msra.mxu0 0.0
    %512 = vmatprep.subr.mxu0 0.0
    %513 = vmatpush1.msra.mxu0 0.0
    %514 = vmatprep.subr.mxu0 0.0
    %515 = vmatpush1.msra.mxu0 0.0
    %516 = vmatprep.subr.mxu0 0.0
    %517 = vmatpush1.msra.mxu0 0.0
    %518 = vmatprep.subr.mxu0 0.0
    %519 = vmatpush1.msra.mxu0 0.0
    %520 = vmatprep.subr.mxu0 0.0
    %521 = vmatpush1.msra.mxu0 0.0
    %522 = vmatprep.subr.mxu0 0.0
    %523 = vmatpush1.msra.mxu0 0.0
    %524 = vmatprep.subr.mxu0 0.0
    %525 = vmatpush1.msra.mxu0 0.0
    %526 = vmatprep.subr.mxu0 0.0
    %527 = vmatpush1.msra.mxu0 0.0
    %528 = vmatprep.subr.mxu0 0.0
    %529 = vmatpush1.msra.mxu0 0.0
    %530 = vmatprep.subr.mxu0 0.0
    %531 = vmatpush1.msra.mxu0 0.0
    %532 = vmatprep.subr.mxu0 0.0
    %533 = vmatpush1.msra.mxu0 0.0
    %534 = vmatprep.subr.mxu0 0.0
    %535 = vmatpush1.msra.mxu0 0.0
    %536 = vmatprep.subr.mxu0 0.0
    %537 = vmatpush1.msra.mxu0 0.0
    %538 = vmatprep.subr.mxu0 0.0
    %539 = vmatpush1.msra.mxu0 0.0
    %540 = vmatprep.subr.mxu0 0.0
    %541 = vmatpush1.msra.mxu0 0.0
    %542 = vmatprep.mubr.f32.mxu0 0.0
    %543 = vmatmul.mubr.f32.gmra.mrb[0].mxu0 %v476
    %v544 = vpop.f32.mrb[0].mxu0
    %v545 = vadd.f32 0.0, %v544
    %v546 = vpop.f32.mrb[0].mxu0
    %547 = vdwg.mxu0
    %v548 = vadd.f32 %v473, %v545
    %v549 = vld [vmem:[%s5] sm:$0x1]
    %v551 = vlaneseq
    %v552 = vshrl.u32 %v551, 7
    %v553 = vsub.s32 0, %v552
    %v554 = vrot.slane %v549, %v553
    %v556 = vadd.f32 %v548, %v554
    %v557 = vmax.f32 %v556, 0.0
    %v558 = vld [vmem:[%s6] sm:$0x1]
    %v560 = vlaneseq
    %v561 = vshrl.u32 %v560, 7
    %v562 = vsub.s32 0, %v561
    %v563 = vrot.slane %v558, %v562
    %v565 = vmul.f32 %v557, %v563
    %v566 = vsel %vm251, %v565, 0.0
    %567 = vadd.xlane.f32.xlu0 %v566
    %v568 = vpop.xlane.xlu0 %567
    %s569 = sld [smem:[#allocation2]]
    %v570 = vstv %s569
    %v571 = vadd.f32 %v568, %v570
    %v572 = vsub.f32 0.0, %v571
    %v573 = vmul.f32 %v572, 1.442695
    %v574 = vpow.pop %v573
    %v575 = vadd.f32 %v574, 1.0
    %v576 = vrcp.pop %v575
    %v577 = vmul.f32 1.0, %v576
    %v579 = vlaneseq
    %v580 = vand.u32 %v579, 127
    %v581 = vlaneseq
    %v582 = vshrl.u32 %v581, 7
    %v583 = vsub.s32 %v580, %v582
    %v584 = vrot.slane %v577, %v583
    %vm586 = vcmask 57344
    %587 = vst.msk [vmem:[#allocation3] sm:$0x1] %vm586, %v584
    // Predicated region
    $region34: #{tpu_custom_call.1} parent=1 // pred_check
      _
    $region35: #{tpu_custom_call.1} parent=1 // pred_check_branch
      %589 = sbr.rel (0) target = $region37
    $region36: #{tpu_custom_call.1} parent=1 // pred_region
      %s591 = ssub.s32 16, 16
      %592 = vsyncadd [#allocation4], %s591
      %s594 = sshll.u32 [#allocation3], 4
      %s595 = int_to_ptr.vmem [resolvable:$true] %s594
      %597 = dma.vmem_to_hbm [thread:$0]  %s595, 16, %s8, [#allocation4]
    $region37: #{tpu_custom_call.1} parent=1 // pred_fallthru
      _
    // Predicated region
    $region38: #{tpu_custom_call.1} parent=1 // pred_check
      _
    $region39: #{tpu_custom_call.1} parent=1 // pred_check_branch
      %599 = sbr.rel (0) target = $region41
    $region40: #{tpu_custom_call.1} parent=1 // pred_region
      %600 = dma.done [#allocation4], 16
    $region41: #{tpu_custom_call.1} parent=1 // pred_fallthru
      _
    %601 = vsyncpa [#allocation4], 1

</llo_original>
